<compile_context>
chip_gen: v6e
topology: v6e:2x2x1
jax: 0.10.0
libtpu: 0.0.40
codegen_flags: <defaults>
</compile_context>

<pallas_src>
import math

import jax
import jax.numpy as jnp
from jax.experimental import pallas as pl
from jax.experimental.pallas import tpu as pltpu


def _make_flatten_dma_kernel(rows, rows_per_chunk, n_chunks, n_slots):
    """Build a kernel that copies `rows` leading-dim rows HBM -> HBM in chunks."""

    def kernel(x_hbm, o_hbm, sem):
        def start(c):
            r0 = c * rows_per_chunk
            nrows = min(rows_per_chunk, rows - r0)  # static per-chunk size
            cp = pltpu.make_async_copy(
                x_hbm.at[pl.ds(r0, nrows)],
                o_hbm.at[pl.ds(r0, nrows)],
                sem.at[c % n_slots],
            )
            cp.start()
            return cp

        # Prime up to `n_slots` outstanding copies, then wait / refill in order.
        # A slot is only reused after its previous copy has been waited on.
        inflight = {c: start(c) for c in range(min(n_slots, n_chunks))}
        for c in range(n_chunks):
            inflight.pop(c).wait()
            nxt = c + n_slots
            if nxt < n_chunks:
                inflight[nxt] = start(nxt)

    return kernel


def flatten(x, *, target_chunk_bytes=4 * 1024 * 1024, max_outstanding=3,
            max_chunks=16):
    """Pallas equivalent of Flatten.forward: returns x reshaped to (B, prod(rest))."""
    B = x.shape[0]
    D = math.prod(x.shape[1:]) if x.ndim > 1 else 1
    total = B * D
    itemsize = jnp.dtype(x.dtype).itemsize

    # Present the contiguous byte stream as a lane-dense (rows, cols) view
    # (metadata-only reshape): cols is the largest power-of-two divisor of
    # `total` up to 128, so the minor dim is as lane-dense as possible and the
    # sublane dim is long enough to chunk.
    cols = 1
    while cols < 128 and total % (cols * 2) == 0:
        cols *= 2
    rows = total // cols
    x2d = x.reshape(rows, cols)

    # Chunk rows into ~target_chunk_bytes pieces (8-row aligned), capped so the
    # statically unrolled copy loop stays small.
    row_bytes = max(1, cols * itemsize)
    rows_per_chunk = max(8, target_chunk_bytes // row_bytes)
    rows_per_chunk = min(rows, ((rows_per_chunk + 7) // 8) * 8)
    n_chunks = pl.cdiv(rows, rows_per_chunk)
    if n_chunks > max_chunks:
        rows_per_chunk = min(rows, ((pl.cdiv(rows, max_chunks) + 7) // 8) * 8)
        n_chunks = pl.cdiv(rows, rows_per_chunk)
    n_slots = max(1, min(max_outstanding, n_chunks))

    kernel = _make_flatten_dma_kernel(rows, rows_per_chunk, n_chunks, n_slots)

    out2d = pl.pallas_call(
        kernel,
        out_shape=jax.ShapeDtypeStruct((rows, cols), x.dtype),
        in_specs=[pl.BlockSpec(memory_space=pl.ANY)],   # raw HBM ref, no auto-DMA
        out_specs=pl.BlockSpec(memory_space=pl.ANY),    # raw HBM ref, written via DMA
        scratch_shapes=[pltpu.SemaphoreType.DMA((n_slots,))],
    )(x2d)

    # Free reshape back to the flattened (B, D) result.
    return out2d.reshape(B, D)


if __name__ == "__main__":
    key = jax.random.PRNGKey(0)
    # Pixel-like observations, NCHW: batch=2, channels=4, spatial=16x16.
    x = jax.random.uniform(key, (2, 4, 16, 16), dtype=jnp.float32) * 255.0

    y = flatten(x)
    jax.block_until_ready(y)

    y_ref = x.reshape(x.shape[0], -1)
    assert y.shape == (x.shape[0], 4 * 16 * 16)
    assert y.dtype == x.dtype
    assert jnp.array_equal(y, y_ref)
    print("KERNEL_OK")
</pallas_src>

<mosaic_0001>
module attributes {stable_mosaic.version = 11 : i64} {
  func.func @kernel(%arg0: memref<16x128xf32, #tpu.memory_space<any>>, %arg1: memref<16x128xf32, #tpu.memory_space<any>>, %arg2: memref<1x!tpu.dma_semaphore, #tpu.memory_space<semaphore_mem>>) attributes {dimension_semantics = [], scalar_prefetch = 0 : i64, scratch_operands = 1 : i64, tpu.core_type = #tpu.core_type<tc>} {
    %c0_i32 = arith.constant 0 : i32
    %c0_i32_0 = arith.constant 0 : i32
    %c0_i32_1 = arith.constant 0 : i32
    %0 = tpu.memref_slice %arg0[%c0_i32_0, %c0_i32_1] : memref<16x128xf32, #tpu.memory_space<any>> -> memref<16x128xf32, #tpu.memory_space<any>>
    %c0_i32_2 = arith.constant 0 : i32
    %c0_i32_3 = arith.constant 0 : i32
    %1 = tpu.memref_slice %arg1[%c0_i32_2, %c0_i32_3] : memref<16x128xf32, #tpu.memory_space<any>> -> memref<16x128xf32, #tpu.memory_space<any>>
    %2 = tpu.memref_slice %arg2[%c0_i32] : memref<1x!tpu.dma_semaphore, #tpu.memory_space<semaphore_mem>> -> memref<1x!tpu.dma_semaphore, #tpu.memory_space<semaphore_mem>>
    %3 = tpu.memref_squeeze %2 : memref<1x!tpu.dma_semaphore, #tpu.memory_space<semaphore_mem>> -> memref<!tpu.dma_semaphore, #tpu.memory_space<semaphore_mem>>
    tpu.enqueue_dma source(%0 : memref<16x128xf32, #tpu.memory_space<any>>) target(%1 : memref<16x128xf32, #tpu.memory_space<any>>) target_semaphore(%3 : memref<!tpu.dma_semaphore, #tpu.memory_space<semaphore_mem>>)
    %c0_i32_4 = arith.constant 0 : i32
    %c0_i32_5 = arith.constant 0 : i32
    %c0_i32_6 = arith.constant 0 : i32
    %4 = tpu.memref_slice %arg0[%c0_i32_5, %c0_i32_6] : memref<16x128xf32, #tpu.memory_space<any>> -> memref<16x128xf32, #tpu.memory_space<any>>
    %c0_i32_7 = arith.constant 0 : i32
    %c0_i32_8 = arith.constant 0 : i32
    %5 = tpu.memref_slice %arg1[%c0_i32_7, %c0_i32_8] : memref<16x128xf32, #tpu.memory_space<any>> -> memref<16x128xf32, #tpu.memory_space<any>>
    %6 = tpu.memref_slice %arg2[%c0_i32_4] : memref<1x!tpu.dma_semaphore, #tpu.memory_space<semaphore_mem>> -> memref<1x!tpu.dma_semaphore, #tpu.memory_space<semaphore_mem>>
    %7 = tpu.memref_squeeze %6 : memref<1x!tpu.dma_semaphore, #tpu.memory_space<semaphore_mem>> -> memref<!tpu.dma_semaphore, #tpu.memory_space<semaphore_mem>>
    tpu.wait_dma2 semaphore(%7 : memref<!tpu.dma_semaphore, #tpu.memory_space<semaphore_mem>>) src(%4 : memref<16x128xf32, #tpu.memory_space<any>>) dst(%5 : memref<16x128xf32, #tpu.memory_space<any>>)
    return
  }
}

</mosaic_0001>

<llo_original>
// kernel: tpu_custom_call.1
$region0: #{tpu_custom_call.1}
  #allocation0 [shape = 'u32[]', space=smem, size = 0x4, offset = 0x4, fixed_abs, tag = 'smem constant byte address 0x4 - core index']
  #allocation1 [shape = 'u32[144,128]{1,0:T(1,128)}', space=vmem, size = 0x12000, scoped, tag = 'internal scratch']
  #allocation2 [shape = 's32[1]{0}', space=sflag, size = 0x4, scoped, tag = 'scratch operand']
  #allocation3 [shape = 's32[]', space=sflag, size = 0x4, offset = 0, fixed_abs, tag = 'sflag constant byte address 0x0 - dummy sync flag']
  #allocation4 [shape = 'u32[0]{0}', space=smem, size = 0, offset = 0, fixed_abs, tag = 'smem constant byte address 0x0 - null']
  %s0 = inlined_call_operand.hbm [shape: f32[16,128], index: 0, kind: input, shape index: {}]
  %s1 = inlined_call_operand.hbm [shape: f32[16,128], index: 1, kind: output, shape index: {}]
  %s2 = sld [smem:[#allocation0]]
  $region2: #{tpu_custom_call.1} parent=0
    _
  %s4 = ssub.s32 1, %s2
  %s5 = scalar_select 0, %s4, %s2
  %s7 = sshll.u32 1, 14
  %s8 = sxor.u32 4294967295, %s7
  %12 = dma.general %s0, 256, %s1, [#allocation2], 131072, [#allocation4], 0, 0
  %s13 = smul.u32 16, 1
  %s14 = sshll.u32 %s13, 4
  %15 = dma.done [#allocation2], %s14
  %16 = vsyncmov [#allocation2]
  %s17 = vpop.sfrf %16
  %p18 = scmp.eq.s32.totalorder %s17, 0
  %p19 = pneg %p18
  %21 = shalt.err (%p19)

</llo_original>
